<compile_context>
chip_gen: v5e
topology: v5e:2x2
jax: 0.10.0
libtpu: 0.0.40
codegen_flags: <defaults>
</compile_context>

<pallas_src>
import numpy as np
import jax
import jax.numpy as jnp
from jax.experimental import pallas as pl
from jax.experimental.pallas import tpu as pltpu


# -----------------------------------------------------------------------------
# Pallas kernel
# -----------------------------------------------------------------------------
def _dlinear_kernel(
    x_ref, m_ref, xori_ref, ind_ref,      # data blocks, each (Bblk, T, F)
    A_ref,                                # (T, T)   moving-average matrix (series decomposition)
    wemb_ref, bemb_ref,                   # (2F, 4D), (1, 4D)  fused embedding weights / bias
    wls_ref, bls_ref,                     # (T, T), (T, 1)     backbone seasonal Linear(T, T)
    wlt_ref, blt_ref,                     # (T, T), (T, 1)     backbone trend    Linear(T, T)
    wout_ref, bout_ref,                   # (2D, F), (1, F)    fused output projection
    imputed_ref,                          # out block (Bblk, T, F)
    sums_ref,                             # out block (1, 4, F): per-block loss partial sums
):
    Bblk, T, F = x_ref.shape
    D2 = wout_ref.shape[0]     # 2 * d_model
    D = D2 // 2

    x = x_ref[...]                              # (Bblk, T, F)
    m = m_ref[...]
    xf = x.reshape(Bblk * T, F)
    mf = m.reshape(Bblk * T, F)

    # --- fused embedding projections: one fat MXU op, 4D (=128 here) lanes ---
    # P[:, :D]    = x @ Wsx           P[:, D:2D]  = x @ Wtx
    # P[:, 2D:3D] = m @ Wsm + b_se    P[:, 3D:4D] = m @ Wtm + b_te
    cat = jnp.concatenate([xf, mf], axis=-1)    # (Bblk*T, 2F)
    P = jnp.dot(cat, wemb_ref[...], preferred_element_type=jnp.float32) + bemb_ref[...]
    PX = P[:, :D2].reshape(Bblk, T, D2)         # x-projections  [seasonal | trend]
    PM = P[:, D2:].reshape(Bblk, T, D2)         # mask-projections + embedding biases

    # --- series decomposition applied AFTER the feature projection -----------
    # (A @ x) @ W == A @ (x @ W): the (T,T) matmul now produces 2D output lanes.
    A_b = jnp.broadcast_to(A_ref[...], (Bblk, T, T))
    APX = jnp.einsum("but,btd->bud", A_b, PX, preferred_element_type=jnp.float32)

    lane = jax.lax.broadcasted_iota(jnp.int32, (1, 1, D2), 2)
    is_seasonal = lane < D
    # seasonal half: (I - A) @ (x @ Wsx) ; trend half: A @ (x @ Wtx)
    emb = PM + jnp.where(is_seasonal, PX - APX, APX)        # (Bblk, T, 2D)

    # --- backbone Linear(T, T) over the time axis (batched over samples) -----
    wls_b = jnp.broadcast_to(wls_ref[...], (Bblk, T, T))
    wlt_b = jnp.broadcast_to(wlt_ref[...], (Bblk, T, T))
    s_bb = jnp.einsum("but,btd->bud", wls_b, emb[:, :, :D],
                      preferred_element_type=jnp.float32) + bls_ref[...][None]
    t_bb = jnp.einsum("but,btd->bud", wlt_b, emb[:, :, D:],
                      preferred_element_type=jnp.float32) + blt_ref[...][None]

    # --- fused output projection: [s_bb | t_bb] @ [Wso^T ; Wto^T] + (bso+bto) -
    bb = jnp.concatenate([s_bb, t_bb], axis=-1).reshape(Bblk * T, D2)
    recon = jnp.dot(bb, wout_ref[...], preferred_element_type=jnp.float32) + bout_ref[...]

    imputed = mf * xf + (1.0 - mf) * recon
    imputed_ref[...] = imputed.reshape(Bblk, T, F)

    # --- SaitsLoss masked-MAE partial sums, kept on the vector path ----------
    err = jnp.abs(recon - xori_ref[...].reshape(Bblk * T, F))
    indf = ind_ref[...].reshape(Bblk * T, F)
    partial = jnp.concatenate([
        jnp.sum(err * mf, axis=0, keepdims=True),
        jnp.sum(mf, axis=0, keepdims=True),
        jnp.sum(err * indf, axis=0, keepdims=True),
        jnp.sum(indf, axis=0, keepdims=True),
    ], axis=0)                                              # (4, F)
    sums_ref[...] = partial[None]


# -----------------------------------------------------------------------------
# Wrapper
# -----------------------------------------------------------------------------
def dlinear_forward(inputs, kparams, *, ORT_weight=1.0, MIT_weight=1.0,
                    training=True, batch_block=8):
    X = inputs["X"]
    B, T, F = X.shape
    D2 = kparams["W_out"].shape[0]      # 2 * d_model
    D4 = kparams["W_emb"].shape[1]      # 4 * d_model

    # Batch-block several samples per grid step.
    Bblk = B if B <= batch_block else batch_block
    nblk = -(-B // Bblk)
    Bpad = nblk * Bblk

    def pad_batch(a):
        return a if Bpad == B else jnp.pad(a, ((0, Bpad - B), (0, 0), (0, 0)))

    Xp = pad_batch(X)
    Mp = pad_batch(inputs["missing_mask"])
    Xop = pad_batch(inputs["X_ori"])
    Ip = pad_batch(inputs["indicating_mask"])

    data_spec = pl.BlockSpec((Bblk, T, F), lambda b: (b, 0, 0))

    def wspec(shape):
        return pl.BlockSpec(shape, lambda b: (0,) * len(shape))

    in_specs = [data_spec] * 4 + [
        wspec((T, T)),                        # A
        wspec((2 * F, D4)), wspec((1, D4)),   # fused embedding
        wspec((T, T)), wspec((T, 1)),         # backbone seasonal
        wspec((T, T)), wspec((T, 1)),         # backbone trend
        wspec((D2, F)), wspec((1, F)),        # fused output projection
    ]
    out_shapes = (jax.ShapeDtypeStruct((Bpad, T, F), jnp.float32),
                  jax.ShapeDtypeStruct((nblk, 4, F), jnp.float32))
    out_specs = [pl.BlockSpec((Bblk, T, F), lambda b: (b, 0, 0)),
                 pl.BlockSpec((1, 4, F), lambda b: (b, 0, 0))]

    imputed, sums = pl.pallas_call(
        _dlinear_kernel,
        out_shape=out_shapes,
        grid_spec=pltpu.PrefetchScalarGridSpec(
            num_scalar_prefetch=0,
            grid=(nblk,),
            in_specs=in_specs,
            out_specs=out_specs,
        ),
        # Batch-block axis is fully independent (per-block outputs) -> megacore
        # shardable on v7x; measured-neutral on v5e/v6e.
        compiler_params=pltpu.CompilerParams(dimension_semantics=("parallel",)),
    )(Xp, Mp, Xop, Ip,
      kparams["A"],
      kparams["W_emb"], kparams["b_emb"],
      kparams["W_ls"], kparams["b_ls"],
      kparams["W_lt"], kparams["b_lt"],
      kparams["W_out"], kparams["b_out"])

    results = {"imputed_data": imputed[:B]}
    if training:
        # TODO(synk): latent_demand_recovery's modified SaitsLoss takes `norm_val`;
        # its exact semantics are not available, so the standard PyPOTS masked-MAE
        # (calc_mae) is used and norm_val is ignored.
        s = jnp.sum(sums, axis=(0, 2))                       # (4,)
        ORT_loss = ORT_weight * (s[0] / (s[1] + 1e-12))
        MIT_loss = MIT_weight * (s[2] / (s[3] + 1e-12))
        results["ORT_loss"] = ORT_loss
        results["MIT_loss"] = MIT_loss
        results["loss"] = ORT_loss + MIT_loss
    return results


# -----------------------------------------------------------------------------
# Parameter construction (deterministic, synthetic)
# -----------------------------------------------------------------------------
def build_moving_avg_matrix(T, k):
    """Matrix A s.t. A @ x == MovingAvgBlock(k, stride=1)(x) with edge replication."""
    pad = (k - 1) // 2
    A = np.zeros((T, T), np.float32)
    for t in range(T):
        for j in range(k):
            src = min(max(t + j - pad, 0), T - 1)
            A[t, src] += 1.0 / k
    return jnp.asarray(A)


def init_torch_style_params(key, T, F, D, window):
    ks = jax.random.split(key, 10)
    p = {
        # nn.Linear(2F, D)
        "W_se": 0.1 * jax.random.normal(ks[0], (D, 2 * F), jnp.float32),
        "b_se": 0.1 * jax.random.normal(ks[1], (D,), jnp.float32),
        "W_te": 0.1 * jax.random.normal(ks[2], (D, 2 * F), jnp.float32),
        "b_te": 0.1 * jax.random.normal(ks[3], (D,), jnp.float32),
        # BackboneDLinear: weight explicitly set to (1/T)*ones in __init__, bias random
        "W_ls": jnp.full((T, T), 1.0 / T, jnp.float32),
        "b_ls": 0.1 * jax.random.normal(ks[4], (T,), jnp.float32),
        "W_lt": jnp.full((T, T), 1.0 / T, jnp.float32),
        "b_lt": 0.1 * jax.random.normal(ks[5], (T,), jnp.float32),
        # nn.Linear(D, F)
        "W_so": 0.1 * jax.random.normal(ks[6], (F, D), jnp.float32),
        "b_so": 0.1 * jax.random.normal(ks[7], (F,), jnp.float32),
        "W_to": 0.1 * jax.random.normal(ks[8], (F, D), jnp.float32),
        "b_to": 0.1 * jax.random.normal(ks[9], (F,), jnp.float32),
        "A": build_moving_avg_matrix(T, window),
    }
    return p


def to_kernel_params(p):
    """Build the fused kernel weights from the torch-style parameters."""
    F, D = p["W_so"].shape                 # nn.Linear(D, F) weight is (F, D)
    Wsx = p["W_se"][:, :F].T               # (F, D)
    Wsm = p["W_se"][:, F:].T
    Wtx = p["W_te"][:, :F].T
    Wtm = p["W_te"][:, F:].T
    zero = jnp.zeros((F, D), jnp.float32)
    # [x | m] @ W_emb -> [x@Wsx | x@Wtx | m@Wsm | m@Wtm]   (2F, 4D)
    W_emb = jnp.concatenate([
        jnp.concatenate([Wsx, Wtx, zero, zero], axis=1),
        jnp.concatenate([zero, zero, Wsm, Wtm], axis=1),
    ], axis=0)
    b_emb = jnp.concatenate([jnp.zeros((2 * D,), jnp.float32),
                             p["b_se"], p["b_te"]])[None, :]          # (1, 4D)
    W_out = jnp.concatenate([p["W_so"].T, p["W_to"].T], axis=0)       # (2D, F)
    b_out = (p["b_so"] + p["b_to"])[None, :]                          # (1, F)
    return dict(
        A=p["A"],
        W_emb=W_emb, b_emb=b_emb,
        W_ls=p["W_ls"], b_ls=p["b_ls"][:, None],
        W_lt=p["W_lt"], b_lt=p["b_lt"][:, None],
        W_out=W_out, b_out=b_out,
    )


# -----------------------------------------------------------------------------
# Pure-JAX reference (mirrors the PyTorch forward exactly) for verification
# -----------------------------------------------------------------------------
def reference_forward(inputs, p, ORT_weight=1.0, MIT_weight=1.0):
    X, mm = inputs["X"], inputs["missing_mask"]
    trend_init = jnp.einsum("ts,bsf->btf", p["A"], X)
    seasonal_init = X - trend_init
    s_cat = jnp.concatenate([seasonal_init, mm], axis=2)
    t_cat = jnp.concatenate([trend_init, mm], axis=2)
    s_emb = s_cat @ p["W_se"].T + p["b_se"]
    t_emb = t_cat @ p["W_te"].T + p["b_te"]
    # permute(0,2,1) -> Linear(T,T) -> permute(0,2,1)
    s_bb = jnp.einsum("btd,ut->bud", s_emb, p["W_ls"]) + p["b_ls"][None, :, None]
    t_bb = jnp.einsum("btd,ut->bud", t_emb, p["W_lt"]) + p["b_lt"][None, :, None]
    s_out = s_bb @ p["W_so"].T + p["b_so"]
    t_out = t_bb @ p["W_to"].T + p["b_to"]
    recon = s_out + t_out
    imputed = mm * X + (1.0 - mm) * recon
    err = jnp.abs(recon - inputs["X_ori"])
    ind = inputs["indicating_mask"]
    ORT = ORT_weight * jnp.sum(err * mm) / (jnp.sum(mm) + 1e-12)
    MIT = MIT_weight * jnp.sum(err * ind) / (jnp.sum(ind) + 1e-12)
    return {"imputed_data": imputed, "ORT_loss": ORT, "MIT_loss": MIT, "loss": ORT + MIT}


# -----------------------------------------------------------------------------
if __name__ == "__main__":
    B, T, F, D, WINDOW = 2, 8, 4, 32, 5   # n_steps=8, n_features=4, d_model=32

    key = jax.random.PRNGKey(0)
    k_param, k_xo, k_m1, k_m2 = jax.random.split(key, 4)

    X_ori = jax.random.normal(k_xo, (B, T, F), jnp.float32)
    missing_mask = (jax.random.uniform(k_m1, (B, T, F)) > 0.2).astype(jnp.float32)
    indicating_mask = ((jax.random.uniform(k_m2, (B, T, F)) > 0.5).astype(jnp.float32)
                       * (1.0 - missing_mask))
    X = X_ori * missing_mask
    norm_val = jnp.ones((B,), jnp.float32)

    inputs = {
        "X": X,
        "missing_mask": missing_mask,
        "X_ori": X_ori,
        "indicating_mask": indicating_mask,
        "norm_val": norm_val,
    }

    torch_params = init_torch_style_params(k_param, T, F, D, WINDOW)
    kernel_params = to_kernel_params(torch_params)

    out = dlinear_forward(inputs, kernel_params, training=True)
    jax.block_until_ready(out)

    ref = reference_forward(inputs, torch_params)
    np.testing.assert_allclose(np.asarray(out["imputed_data"]),
                               np.asarray(ref["imputed_data"]), rtol=1e-4, atol=1e-4)
    np.testing.assert_allclose(float(out["ORT_loss"]), float(ref["ORT_loss"]),
                               rtol=1e-4, atol=1e-4)
    np.testing.assert_allclose(float(out["MIT_loss"]), float(ref["MIT_loss"]),
                               rtol=1e-4, atol=1e-4)
    np.testing.assert_allclose(float(out["loss"]), float(ref["loss"]),
                               rtol=1e-4, atol=1e-4)

    print("KERNEL_OK")
</pallas_src>

<mosaic_0001>
module attributes {stable_mosaic.version = 11 : i64} {
  func.func @_dlinear_kernel(%arg0: i32, %arg1: memref<2x8x4xf32, #tpu.memory_space<vmem>>, %arg2: memref<2x8x4xf32, #tpu.memory_space<vmem>>, %arg3: memref<2x8x4xf32, #tpu.memory_space<vmem>>, %arg4: memref<2x8x4xf32, #tpu.memory_space<vmem>>, %arg5: memref<8x8xf32, #tpu.memory_space<vmem>>, %arg6: memref<8x128xf32, #tpu.memory_space<vmem>>, %arg7: memref<1x128xf32, #tpu.memory_space<vmem>>, %arg8: memref<8x8xf32, #tpu.memory_space<vmem>>, %arg9: memref<8x1xf32, #tpu.memory_space<vmem>>, %arg10: memref<8x8xf32, #tpu.memory_space<vmem>>, %arg11: memref<8x1xf32, #tpu.memory_space<vmem>>, %arg12: memref<64x4xf32, #tpu.memory_space<vmem>>, %arg13: memref<1x4xf32, #tpu.memory_space<vmem>>, %arg14: memref<2x8x4xf32, #tpu.memory_space<vmem>>, %arg15: memref<1x4x4xf32, #tpu.memory_space<vmem>>) attributes {dimension_semantics = [#tpu.dimension_semantics<parallel>], iteration_bounds = array<i64: 1>, scalar_prefetch = 0 : i64, scratch_operands = 0 : i64, tpu.core_type = #tpu.core_type<tc>, window_params = [{transform_indices = @transform_0, window_bounds = array<i64: 2, 8, 4>}, {transform_indices = @transform_1, window_bounds = array<i64: 2, 8, 4>}, {transform_indices = @transform_2, window_bounds = array<i64: 2, 8, 4>}, {transform_indices = @transform_3, window_bounds = array<i64: 2, 8, 4>}, {pipeline_mode = #tpu.pipeline_mode<synchronous>, transform_indices = @transform_4, window_bounds = array<i64: 8, 8>}, {pipeline_mode = #tpu.pipeline_mode<synchronous>, transform_indices = @transform_5, window_bounds = array<i64: 8, 128>}, {pipeline_mode = #tpu.pipeline_mode<synchronous>, transform_indices = @transform_6, window_bounds = array<i64: 1, 128>}, {pipeline_mode = #tpu.pipeline_mode<synchronous>, transform_indices = @transform_7, window_bounds = array<i64: 8, 8>}, {pipeline_mode = #tpu.pipeline_mode<synchronous>, transform_indices = @transform_8, window_bounds = array<i64: 8, 1>}, {pipeline_mode = #tpu.pipeline_mode<synchronous>, transform_indices = @transform_9, window_bounds = array<i64: 8, 8>}, {pipeline_mode = #tpu.pipeline_mode<synchronous>, transform_indices = @transform_10, window_bounds = array<i64: 8, 1>}, {pipeline_mode = #tpu.pipeline_mode<synchronous>, transform_indices = @transform_11, window_bounds = array<i64: 64, 4>}, {pipeline_mode = #tpu.pipeline_mode<synchronous>, transform_indices = @transform_12, window_bounds = array<i64: 1, 4>}, {transform_indices = @transform_13, window_bounds = array<i64: 2, 8, 4>}, {transform_indices = @transform_14, window_bounds = array<i64: 1, 4, 4>}]} {
    %c0 = arith.constant 0 : index
    %c0_0 = arith.constant 0 : index
    %c0_1 = arith.constant 0 : index
    %0 = vector.load %arg1[%c0, %c0_0, %c0_1] : memref<2x8x4xf32, #tpu.memory_space<vmem>>, vector<2x8x4xf32>
    %c0_2 = arith.constant 0 : index
    %c0_3 = arith.constant 0 : index
    %c0_4 = arith.constant 0 : index
    %1 = vector.load %arg2[%c0_2, %c0_3, %c0_4] : memref<2x8x4xf32, #tpu.memory_space<vmem>>, vector<2x8x4xf32>
    %2 = vector.shape_cast %0 : vector<2x8x4xf32> to vector<16x4xf32>
    %3 = vector.shape_cast %1 : vector<2x8x4xf32> to vector<16x4xf32>
    %4 = tpu.concatenate %2, %3 in 1 : vector<16x4xf32>, vector<16x4xf32> -> vector<16x8xf32>
    %c0_5 = arith.constant 0 : index
    %c0_6 = arith.constant 0 : index
    %5 = vector.load %arg6[%c0_5, %c0_6] : memref<8x128xf32, #tpu.memory_space<vmem>>, vector<8x128xf32>
    %cst = arith.constant dense<0.000000e+00> : vector<16x128xf32>
    %6 = tpu.matmul %4, %5, %cst {dimension_numbers = #tpu.dot_dimension_numbers<[1], [0], [0], [1], [0, 0, 1, 1], [], []>} : vector<16x8xf32>, vector<8x128xf32>, vector<16x128xf32> -> vector<16x128xf32>
    %c0_7 = arith.constant 0 : index
    %c0_8 = arith.constant 0 : index
    %7 = vector.load %arg7[%c0_7, %c0_8] : memref<1x128xf32, #tpu.memory_space<vmem>>, vector<1x128xf32>
    %8 = vector.broadcast %7 : vector<1x128xf32> to vector<16x128xf32>
    %9 = arith.addf %6, %8 : vector<16x128xf32>
    %10 = vector.extract_strided_slice %9 {offsets = [0, 0], sizes = [16, 64], strides = [1, 1]} : vector<16x128xf32> to vector<16x64xf32>
    %11 = vector.shape_cast %10 : vector<16x64xf32> to vector<2x8x64xf32>
    %12 = vector.extract_strided_slice %9 {offsets = [0, 64], sizes = [16, 64], strides = [1, 1]} : vector<16x128xf32> to vector<16x64xf32>
    %13 = vector.shape_cast %12 : vector<16x64xf32> to vector<2x8x64xf32>
    %c0_9 = arith.constant 0 : index
    %c0_10 = arith.constant 0 : index
    %14 = vector.load %arg5[%c0_9, %c0_10] : memref<8x8xf32, #tpu.memory_space<vmem>>, vector<8x8xf32>
    %15 = vector.shape_cast %14 : vector<8x8xf32> to vector<1x8x8xf32>
    %16 = vector.broadcast %15 : vector<1x8x8xf32> to vector<2x8x8xf32>
    "tpu.trace_start"() <{level = 10 : i32, message = "but,btd->bud"}> : () -> ()
    %cst_11 = arith.constant dense<0.000000e+00> : vector<2x8x64xf32>
    %17 = tpu.matmul %16, %11, %cst_11 {dimension_numbers = #tpu.dot_dimension_numbers<[2], [1], [1], [2], [0, 0, 0, 1, 1, 2], [0], [0]>} : vector<2x8x8xf32>, vector<2x8x64xf32>, vector<2x8x64xf32> -> vector<2x8x64xf32>
    "tpu.trace_stop"() : () -> ()
    %18 = tpu.iota {dimensions = array<i32: 2>} : vector<1x1x64xi32>
    %c32_i32 = arith.constant 32 : i32
    %19 = vector.broadcast %c32_i32 : i32 to vector<1x1x64xi32>
    %20 = arith.cmpi slt, %18, %19 : vector<1x1x64xi32>
    %21 = arith.subf %11, %17 : vector<2x8x64xf32>
    %22 = vector.shape_cast %20 : vector<1x1x64xi1> to vector<1x1x64xi1>
    %23 = vector.broadcast %22 : vector<1x1x64xi1> to vector<2x8x64xi1>
    %24 = arith.select %23, %21, %17 : vector<2x8x64xi1>, vector<2x8x64xf32>
    %25 = arith.addf %13, %24 : vector<2x8x64xf32>
    %c0_12 = arith.constant 0 : index
    %c0_13 = arith.constant 0 : index
    %26 = vector.load %arg8[%c0_12, %c0_13] : memref<8x8xf32, #tpu.memory_space<vmem>>, vector<8x8xf32>
    %27 = vector.shape_cast %26 : vector<8x8xf32> to vector<1x8x8xf32>
    %28 = vector.broadcast %27 : vector<1x8x8xf32> to vector<2x8x8xf32>
    %c0_14 = arith.constant 0 : index
    %c0_15 = arith.constant 0 : index
    %29 = vector.load %arg10[%c0_14, %c0_15] : memref<8x8xf32, #tpu.memory_space<vmem>>, vector<8x8xf32>
    %30 = vector.shape_cast %29 : vector<8x8xf32> to vector<1x8x8xf32>
    %31 = vector.broadcast %30 : vector<1x8x8xf32> to vector<2x8x8xf32>
    %32 = vector.extract_strided_slice %25 {offsets = [0, 0, 0], sizes = [2, 8, 32], strides = [1, 1, 1]} : vector<2x8x64xf32> to vector<2x8x32xf32>
    "tpu.trace_start"() <{level = 10 : i32, message = "but,btd->bud"}> : () -> ()
    %cst_16 = arith.constant dense<0.000000e+00> : vector<2x8x32xf32>
    %33 = tpu.matmul %28, %32, %cst_16 {dimension_numbers = #tpu.dot_dimension_numbers<[2], [1], [1], [2], [0, 0, 0, 1, 1, 2], [0], [0]>} : vector<2x8x8xf32>, vector<2x8x32xf32>, vector<2x8x32xf32> -> vector<2x8x32xf32>
    "tpu.trace_stop"() : () -> ()
    %c0_17 = arith.constant 0 : index
    %c0_18 = arith.constant 0 : index
    %34 = vector.load %arg9[%c0_17, %c0_18] : memref<8x1xf32, #tpu.memory_space<vmem>>, vector<8x1xf32>
    %35 = vector.shape_cast %34 : vector<8x1xf32> to vector<1x8x1xf32>
    %36 = vector.broadcast %35 : vector<1x8x1xf32> to vector<2x8x32xf32>
    %37 = arith.addf %33, %36 : vector<2x8x32xf32>
    %38 = vector.extract_strided_slice %25 {offsets = [0, 0, 32], sizes = [2, 8, 32], strides = [1, 1, 1]} : vector<2x8x64xf32> to vector<2x8x32xf32>
    "tpu.trace_start"() <{level = 10 : i32, message = "but,btd->bud"}> : () -> ()
    %cst_19 = arith.constant dense<0.000000e+00> : vector<2x8x32xf32>
    %39 = tpu.matmul %31, %38, %cst_19 {dimension_numbers = #tpu.dot_dimension_numbers<[2], [1], [1], [2], [0, 0, 0, 1, 1, 2], [0], [0]>} : vector<2x8x8xf32>, vector<2x8x32xf32>, vector<2x8x32xf32> -> vector<2x8x32xf32>
    "tpu.trace_stop"() : () -> ()
    %c0_20 = arith.constant 0 : index
    %c0_21 = arith.constant 0 : index
    %40 = vector.load %arg11[%c0_20, %c0_21] : memref<8x1xf32, #tpu.memory_space<vmem>>, vector<8x1xf32>
    %41 = vector.shape_cast %40 : vector<8x1xf32> to vector<1x8x1xf32>
    %42 = vector.broadcast %41 : vector<1x8x1xf32> to vector<2x8x32xf32>
    %43 = arith.addf %39, %42 : vector<2x8x32xf32>
    %44 = tpu.concatenate %37, %43 in 2 : vector<2x8x32xf32>, vector<2x8x32xf32> -> vector<2x8x64xf32>
    %45 = vector.shape_cast %44 : vector<2x8x64xf32> to vector<16x64xf32>
    %c0_22 = arith.constant 0 : index
    %c0_23 = arith.constant 0 : index
    %46 = vector.load %arg12[%c0_22, %c0_23] : memref<64x4xf32, #tpu.memory_space<vmem>>, vector<64x4xf32>
    %cst_24 = arith.constant dense<0.000000e+00> : vector<16x4xf32>
    %47 = tpu.matmul %45, %46, %cst_24 {dimension_numbers = #tpu.dot_dimension_numbers<[1], [0], [0], [1], [0, 0, 1, 1], [], []>} : vector<16x64xf32>, vector<64x4xf32>, vector<16x4xf32> -> vector<16x4xf32>
    %c0_25 = arith.constant 0 : index
    %c0_26 = arith.constant 0 : index
    %48 = vector.load %arg13[%c0_25, %c0_26] : memref<1x4xf32, #tpu.memory_space<vmem>>, vector<1x4xf32>
    %49 = vector.broadcast %48 : vector<1x4xf32> to vector<16x4xf32>
    %50 = arith.addf %47, %49 : vector<16x4xf32>
    %51 = arith.mulf %3, %2 : vector<16x4xf32>
    %cst_27 = arith.constant 1.000000e+00 : f32
    %52 = vector.broadcast %cst_27 : f32 to vector<16x4xf32>
    %53 = arith.subf %52, %3 : vector<16x4xf32>
    %54 = arith.mulf %53, %50 : vector<16x4xf32>
    %55 = arith.addf %51, %54 : vector<16x4xf32>
    %56 = vector.shape_cast %55 : vector<16x4xf32> to vector<2x8x4xf32>
    %c0_28 = arith.constant 0 : index
    %c0_29 = arith.constant 0 : index
    %c0_30 = arith.constant 0 : index
    %57 = vector.load %arg14[%c0_28, %c0_29, %c0_30] : memref<2x8x4xf32, #tpu.memory_space<vmem>>, vector<2x8x4xf32>
    tpu.vector_store %arg14[%c0_28, %c0_29, %c0_30], %56 {strides = array<i32>} : memref<2x8x4xf32, #tpu.memory_space<vmem>>, vector<2x8x4xf32>,
    %c0_31 = arith.constant 0 : index
    %c0_32 = arith.constant 0 : index
    %c0_33 = arith.constant 0 : index
    %58 = vector.load %arg3[%c0_31, %c0_32, %c0_33] : memref<2x8x4xf32, #tpu.memory_space<vmem>>, vector<2x8x4xf32>
    %59 = vector.shape_cast %58 : vector<2x8x4xf32> to vector<16x4xf32>
    %60 = arith.subf %50, %59 : vector<16x4xf32>
    %61 = math.absf %60 : vector<16x4xf32>
    %c0_34 = arith.constant 0 : index
    %c0_35 = arith.constant 0 : index
    %c0_36 = arith.constant 0 : index
    %62 = vector.load %arg4[%c0_34, %c0_35, %c0_36] : memref<2x8x4xf32, #tpu.memory_space<vmem>>, vector<2x8x4xf32>
    %63 = vector.shape_cast %62 : vector<2x8x4xf32> to vector<16x4xf32>
    %64 = arith.mulf %61, %3 : vector<16x4xf32>
    %cst_37 = arith.constant dense<0.000000e+00> : vector<4xf32>
    %65 = vector.multi_reduction <add>, %64, %cst_37 [0] : vector<16x4xf32> to vector<4xf32>
    %66 = vector.shape_cast %65 : vector<4xf32> to vector<1x4xf32>
    %cst_38 = arith.constant dense<0.000000e+00> : vector<4xf32>
    %67 = vector.multi_reduction <add>, %3, %cst_38 [0] : vector<16x4xf32> to vector<4xf32>
    %68 = vector.shape_cast %67 : vector<4xf32> to vector<1x4xf32>
    %69 = arith.mulf %61, %63 : vector<16x4xf32>
    %cst_39 = arith.constant dense<0.000000e+00> : vector<4xf32>
    %70 = vector.multi_reduction <add>, %69, %cst_39 [0] : vector<16x4xf32> to vector<4xf32>
    %71 = vector.shape_cast %70 : vector<4xf32> to vector<1x4xf32>
    %cst_40 = arith.constant dense<0.000000e+00> : vector<4xf32>
    %72 = vector.multi_reduction <add>, %63, %cst_40 [0] : vector<16x4xf32> to vector<4xf32>
    %73 = vector.shape_cast %72 : vector<4xf32> to vector<1x4xf32>
    %74 = tpu.concatenate %66, %68, %71, %73 in 0 : vector<1x4xf32>, vector<1x4xf32>, vector<1x4xf32>, vector<1x4xf32> -> vector<4x4xf32>
    %75 = vector.shape_cast %74 : vector<4x4xf32> to vector<1x4x4xf32>
    %c0_41 = arith.constant 0 : index
    %c0_42 = arith.constant 0 : index
    %c0_43 = arith.constant 0 : index
    %76 = vector.load %arg15[%c0_41, %c0_42, %c0_43] : memref<1x4x4xf32, #tpu.memory_space<vmem>>, vector<1x4x4xf32>
    tpu.vector_store %arg15[%c0_41, %c0_42, %c0_43], %75 {strides = array<i32>} : memref<1x4x4xf32, #tpu.memory_space<vmem>>, vector<1x4x4xf32>,
    return
  }
  func.func @transform_0(%arg0: i32) -> (i32, i32, i32) {
    %c0_i32 = arith.constant 0 : i32
    %c0_i32_0 = arith.constant 0 : i32
    %c0_i32_1 = arith.constant 0 : i32
    return %arg0, %c0_i32, %c0_i32_0 : i32, i32, i32
  }
  func.func @transform_1(%arg0: i32) -> (i32, i32, i32) {
    %c0_i32 = arith.constant 0 : i32
    %c0_i32_0 = arith.constant 0 : i32
    %c0_i32_1 = arith.constant 0 : i32
    return %arg0, %c0_i32, %c0_i32_0 : i32, i32, i32
  }
  func.func @transform_2(%arg0: i32) -> (i32, i32, i32) {
    %c0_i32 = arith.constant 0 : i32
    %c0_i32_0 = arith.constant 0 : i32
    %c0_i32_1 = arith.constant 0 : i32
    return %arg0, %c0_i32, %c0_i32_0 : i32, i32, i32
  }
  func.func @transform_3(%arg0: i32) -> (i32, i32, i32) {
    %c0_i32 = arith.constant 0 : i32
    %c0_i32_0 = arith.constant 0 : i32
    %c0_i32_1 = arith.constant 0 : i32
    return %arg0, %c0_i32, %c0_i32_0 : i32, i32, i32
  }
  func.func @transform_4(%arg0: i32) -> (i32, i32) {
    %c0_i32 = arith.constant 0 : i32
    %c0_i32_0 = arith.constant 0 : i32
    %c0_i32_1 = arith.constant 0 : i32
    return %c0_i32, %c0_i32_0 : i32, i32
  }
  func.func @transform_5(%arg0: i32) -> (i32, i32) {
    %c0_i32 = arith.constant 0 : i32
    %c0_i32_0 = arith.constant 0 : i32
    %c0_i32_1 = arith.constant 0 : i32
    return %c0_i32, %c0_i32_0 : i32, i32
  }
  func.func @transform_6(%arg0: i32) -> (i32, i32) {
    %c0_i32 = arith.constant 0 : i32
    %c0_i32_0 = arith.constant 0 : i32
    %c0_i32_1 = arith.constant 0 : i32
    return %c0_i32, %c0_i32_0 : i32, i32
  }
  func.func @transform_7(%arg0: i32) -> (i32, i32) {
    %c0_i32 = arith.constant 0 : i32
    %c0_i32_0 = arith.constant 0 : i32
    %c0_i32_1 = arith.constant 0 : i32
    return %c0_i32, %c0_i32_0 : i32, i32
  }
  func.func @transform_8(%arg0: i32) -> (i32, i32) {
    %c0_i32 = arith.constant 0 : i32
    %c0_i32_0 = arith.constant 0 : i32
    %c0_i32_1 = arith.constant 0 : i32
    return %c0_i32, %c0_i32_0 : i32, i32
  }
  func.func @transform_9(%arg0: i32) -> (i32, i32) {
    %c0_i32 = arith.constant 0 : i32
    %c0_i32_0 = arith.constant 0 : i32
    %c0_i32_1 = arith.constant 0 : i32
    return %c0_i32, %c0_i32_0 : i32, i32
  }
  func.func @transform_10(%arg0: i32) -> (i32, i32) {
    %c0_i32 = arith.constant 0 : i32
    %c0_i32_0 = arith.constant 0 : i32
    %c0_i32_1 = arith.constant 0 : i32
    return %c0_i32, %c0_i32_0 : i32, i32
  }
  func.func @transform_11(%arg0: i32) -> (i32, i32) {
    %c0_i32 = arith.constant 0 : i32
    %c0_i32_0 = arith.constant 0 : i32
    %c0_i32_1 = arith.constant 0 : i32
    return %c0_i32, %c0_i32_0 : i32, i32
  }
  func.func @transform_12(%arg0: i32) -> (i32, i32) {
    %c0_i32 = arith.constant 0 : i32
    %c0_i32_0 = arith.constant 0 : i32
    %c0_i32_1 = arith.constant 0 : i32
    return %c0_i32, %c0_i32_0 : i32, i32
  }
  func.func @transform_13(%arg0: i32) -> (i32, i32, i32) {
    %c0_i32 = arith.constant 0 : i32
    %c0_i32_0 = arith.constant 0 : i32
    %c0_i32_1 = arith.constant 0 : i32
    return %arg0, %c0_i32, %c0_i32_0 : i32, i32, i32
  }
  func.func @transform_14(%arg0: i32) -> (i32, i32, i32) {
    %c0_i32 = arith.constant 0 : i32
    %c0_i32_0 = arith.constant 0 : i32
    %c0_i32_1 = arith.constant 0 : i32
    return %arg0, %c0_i32, %c0_i32_0 : i32, i32, i32
  }
}

</mosaic_0001>

<llo_original>
// kernel: tpu_custom_call.1
$region0: #{tpu_custom_call.1}
  #allocation0 [shape = 'u32[]', space=smem, size = 0x4, offset = 0x4, fixed_abs, tag = 'smem constant byte address 0x4 - core index']
  #allocation1 [shape = 'u32[72,128]{1,0:T(1,128)}', space=vmem, size = 0x9000, scoped, tag = 'internal scratch']
  %s0 = inlined_call_operand.vmem [shape: f32[2,8,4], index: 0, kind: input, shape index: {}]
  %s1 = inlined_call_operand.vmem [shape: f32[2,8,4], index: 1, kind: input, shape index: {}]
  %s2 = inlined_call_operand.vmem [shape: f32[2,8,4], index: 2, kind: input, shape index: {}]
  %s3 = inlined_call_operand.vmem [shape: f32[2,8,4], index: 3, kind: input, shape index: {}]
  %s4 = inlined_call_operand.vmem [shape: f32[8,8], index: 4, kind: input, shape index: {}]
  %s5 = inlined_call_operand.vmem [shape: f32[8,128], index: 5, kind: input, shape index: {}]
  %s6 = inlined_call_operand.vmem [shape: f32[1,128], index: 6, kind: input, shape index: {}]
  %s7 = inlined_call_operand.vmem [shape: f32[8,8], index: 7, kind: input, shape index: {}]
  %s8 = inlined_call_operand.vmem [shape: f32[8,1], index: 8, kind: input, shape index: {}]
  %s9 = inlined_call_operand.vmem [shape: f32[8,8], index: 9, kind: input, shape index: {}]
  %s10 = inlined_call_operand.vmem [shape: f32[8,1], index: 10, kind: input, shape index: {}]
  %s11 = inlined_call_operand.vmem [shape: f32[64,4], index: 11, kind: input, shape index: {}]
  %s12 = inlined_call_operand.vmem [shape: f32[1,4], index: 12, kind: input, shape index: {}]
  %s13 = inlined_call_operand.vmem [shape: f32[2,8,4], index: 13, kind: output, shape index: {0}]
  %s14 = inlined_call_operand.hbm [shape: f32[1,4,4], index: 14, kind: output, shape index: {1}]
  %15 = xla_tuple %s13, %s14
  %s16 = sld [smem:[#allocation0]]
  $region70: #{tpu_custom_call.1} parent=0
    _
  %s18 = ssub.s32 1, %s16
  %s19 = scalar_select 0, %s18, %s16
  $region1: #{tpu_custom_call.1} parent=0
    #allocation2 [shape = 'u8[2048]{0}', space=vmem, size = 0x800, scoped, tag = 'output window, operand 1, single buffered']
    #allocation3 [shape = 's32[1]{0}', space=sflag, size = 0x4, scoped, tag = 'scoped memory for tpu_custom_call.1']
    %20 = vsyncpa [#allocation3], 0
    // Predicated region
    $region2: #{tpu_custom_call.1} parent=1 // pred_check
      _
    $region3: #{tpu_custom_call.1} parent=1 // pred_check_branch
      %22 = sbr.rel (0) target = $region5
    $region4: #{tpu_custom_call.1} parent=1 // pred_region
      _
    $region5: #{tpu_custom_call.1} parent=1 // pred_fallthru
      _
    // Predicated region
    $region6: #{tpu_custom_call.1} parent=1 // pred_check
      _
    $region7: #{tpu_custom_call.1} parent=1 // pred_check_branch
      %24 = sbr.rel (0) target = $region9
    $region8: #{tpu_custom_call.1} parent=1 // pred_region
      _
    $region9: #{tpu_custom_call.1} parent=1 // pred_fallthru
      _
    // Predicated region
    $region10: #{tpu_custom_call.1} parent=1 // pred_check
      _
    $region11: #{tpu_custom_call.1} parent=1 // pred_check_branch
      %26 = sbr.rel (0) target = $region13
    $region12: #{tpu_custom_call.1} parent=1 // pred_region
      _
    $region13: #{tpu_custom_call.1} parent=1 // pred_fallthru
      _
    // Predicated region
    $region14: #{tpu_custom_call.1} parent=1 // pred_check
      _
    $region15: #{tpu_custom_call.1} parent=1 // pred_check_branch
      %28 = sbr.rel (0) target = $region17
    $region16: #{tpu_custom_call.1} parent=1 // pred_region
      _
    $region17: #{tpu_custom_call.1} parent=1 // pred_fallthru
      _
    // Predicated region
    $region18: #{tpu_custom_call.1} parent=1 // pred_check
      _
    $region19: #{tpu_custom_call.1} parent=1 // pred_check_branch
      %30 = sbr.rel (0) target = $region21
    $region20: #{tpu_custom_call.1} parent=1 // pred_region
      _
    $region21: #{tpu_custom_call.1} parent=1 // pred_fallthru
      _
    // Predicated region
    $region22: #{tpu_custom_call.1} parent=1 // pred_check
      _
    $region23: #{tpu_custom_call.1} parent=1 // pred_check_branch
      %32 = sbr.rel (0) target = $region25
    $region24: #{tpu_custom_call.1} parent=1 // pred_region
      _
    $region25: #{tpu_custom_call.1} parent=1 // pred_fallthru
      _
    // Predicated region
    $region26: #{tpu_custom_call.1} parent=1 // pred_check
      _
    $region27: #{tpu_custom_call.1} parent=1 // pred_check_branch
      %34 = sbr.rel (0) target = $region29
    $region28: #{tpu_custom_call.1} parent=1 // pred_region
      _
    $region29: #{tpu_custom_call.1} parent=1 // pred_fallthru
      _
    // Predicated region
    $region30: #{tpu_custom_call.1} parent=1 // pred_check
      _
    $region31: #{tpu_custom_call.1} parent=1 // pred_check_branch
      %36 = sbr.rel (0) target = $region33
    $region32: #{tpu_custom_call.1} parent=1 // pred_region
      _
    $region33: #{tpu_custom_call.1} parent=1 // pred_fallthru
      _
    // Predicated region
    $region34: #{tpu_custom_call.1} parent=1 // pred_check
      _
    $region35: #{tpu_custom_call.1} parent=1 // pred_check_branch
      %38 = sbr.rel (0) target = $region37
    $region36: #{tpu_custom_call.1} parent=1 // pred_region
      _
    $region37: #{tpu_custom_call.1} parent=1 // pred_fallthru
      _
    // Predicated region
    $region38: #{tpu_custom_call.1} parent=1 // pred_check
      _
    $region39: #{tpu_custom_call.1} parent=1 // pred_check_branch
      %40 = sbr.rel (0) target = $region41
    $region40: #{tpu_custom_call.1} parent=1 // pred_region
      _
    $region41: #{tpu_custom_call.1} parent=1 // pred_fallthru
      _
    // Predicated region
    $region42: #{tpu_custom_call.1} parent=1 // pred_check
      _
    $region43: #{tpu_custom_call.1} parent=1 // pred_check_branch
      %42 = sbr.rel (0) target = $region45
    $region44: #{tpu_custom_call.1} parent=1 // pred_region
      _
    $region45: #{tpu_custom_call.1} parent=1 // pred_fallthru
      _
    // Predicated region
    $region46: #{tpu_custom_call.1} parent=1 // pred_check
      _
    $region47: #{tpu_custom_call.1} parent=1 // pred_check_branch
      %44 = sbr.rel (0) target = $region49
    $region48: #{tpu_custom_call.1} parent=1 // pred_region
      _
    $region49: #{tpu_custom_call.1} parent=1 // pred_fallthru
      _
    // Predicated region
    $region50: #{tpu_custom_call.1} parent=1 // pred_check
      _
    $region51: #{tpu_custom_call.1} parent=1 // pred_check_branch
      %46 = sbr.rel (0) target = $region53
    $region52: #{tpu_custom_call.1} parent=1 // pred_region
      _
    $region53: #{tpu_custom_call.1} parent=1 // pred_fallthru
      _
    %v47 = vld [vmem:[%s0] sm:$0xff]
    %v48 = vld [vmem:[%s0 + $0x8] sm:$0xff]
    %v49 = vld [vmem:[%s1] sm:$0xff]
    %v50 = vld [vmem:[%s1 + $0x8] sm:$0xff]
    %53 = vrot.lane.b32.xlu0 %v49, 4
    %v54 = vpop.permute.xlu0 %53
    %55 = vrot.lane.b32.xlu0 %v50, 4
    %v56 = vpop.permute.xlu0 %55
    %vm59 = vcmask 31744
    %v60 = vsel %vm59, %v47, %v54
    %v61 = vsel %vm59, %v48, %v56
    %v62 = vld [vmem:[%s5] sm:$0xff]
    %v63 = vld [vmem:[%s6] sm:$0x1]
    %v65 = vperm.slane %v63, 0
    %vm67 = vcmask 64512
    %v69 = vsel %vm67, %v60, 0
    %v72 = vsel %vm67, %v61, 0
    %74 = vmatpush.msra.mxu0 0.0
    %75 = vmatpush.msra.mxu0 0.0
    %76 = vmatpush.msra.mxu0 0.0
    %77 = vmatpush.msra.mxu0 0.0
    %78 = vmatpush.msra.mxu0 0.0
    %79 = vmatpush.msra.mxu0 0.0
    %80 = vmatpush.msra.mxu0 0.0
    %81 = vmatpush.msra.mxu0 0.0
    %82 = vmatpush.msra.mxu0 0.0
    %83 = vmatpush.msra.mxu0 0.0
    %84 = vmatpush.msra.mxu0 0.0
    %85 = vmatpush.msra.mxu0 0.0
    %86 = vmatpush.msra.mxu0 0.0
    %87 = vmatpush.msra.mxu0 0.0
    %88 = vmatpush.msra.mxu0 0.0
    %89 = vmatpush.msra.mxu0 %v62
    %90 = vmatmul.f32.gmra.mxu0 %v69
    %v91 = vpop.f32.mrf.mxu0
    %v92 = vadd.f32 %v65, %v91
    %93 = vmatmul.f32.gmra.mxu0 %v72
    %v94 = vpop.f32.mrf.mxu0
    %v95 = vadd.f32 %v65, %v94
    %96 = vdwg.mxu0
    %v97 = vld [vmem:[%s4] sm:$0xff]
    %v99 = vsel %vm67, %v97, 0
    %101 = vmatpush.msra.mxu0 0.0
    %102 = vmatpush.msra.mxu0 0.0
    %103 = vmatpush.msra.mxu0 0.0
    %104 = vmatpush.msra.mxu0 0.0
    %105 = vmatpush.msra.mxu0 0.0
    %106 = vmatpush.msra.mxu0 0.0
    %107 = vmatpush.msra.mxu0 0.0
    %108 = vmatpush.msra.mxu0 0.0
    %109 = vmatpush.msra.mxu0 0.0
    %110 = vmatpush.msra.mxu0 0.0
    %111 = vmatpush.msra.mxu0 0.0
    %112 = vmatpush.msra.mxu0 0.0
    %113 = vmatpush.msra.mxu0 0.0
    %114 = vmatpush.msra.mxu0 0.0
    %115 = vmatpush.msra.mxu0 0.0
    %116 = vmatpush.msra.mxu0 %v92
    %117 = vmatmul.f32.gmra.mxu0 %v99
    %v118 = vpop.f32.mrf.mxu0
    %v119 = vadd.f32 0.0, %v118
    %120 = vdwg.mxu0
    %121 = vmatpush.msra.mxu0 0.0
    %122 = vmatpush.msra.mxu0 0.0
    %123 = vmatpush.msra.mxu0 0.0
    %124 = vmatpush.msra.mxu0 0.0
    %125 = vmatpush.msra.mxu0 0.0
    %126 = vmatpush.msra.mxu0 0.0
    %127 = vmatpush.msra.mxu0 0.0
    %128 = vmatpush.msra.mxu0 0.0
    %129 = vmatpush.msra.mxu0 0.0
    %130 = vmatpush.msra.mxu0 0.0
    %131 = vmatpush.msra.mxu0 0.0
    %132 = vmatpush.msra.mxu0 0.0
    %133 = vmatpush.msra.mxu0 0.0
    %134 = vmatpush.msra.mxu0 0.0
    %135 = vmatpush.msra.mxu0 0.0
    %136 = vmatpush.msra.mxu0 %v95
    %137 = vmatmul.f32.gmra.mxu0 %v99
    %v138 = vpop.f32.mrf.mxu0
    %v139 = vadd.f32 0.0, %v138
    %140 = vdwg.mxu0
    %v141 = vlaneseq
    %v142 = vand.u32 %v141, 127
    %vm143 = vcmp.lt.s32.totalorder %v142, 32
    %v144 = vsub.f32 %v92, %v119
    %v145 = vsub.f32 %v95, %v139
    %v146 = vsel %vm143, 1, 0
    %vm147 = vcmp.eq.s32.totalorder %v146, 1
    %v148 = vsel %vm147, %v144, %v119
    %v149 = vsel %vm147, %v145, %v139
    %152 = vrot.lane.b32.xlu0 %v148, 64
    %v153 = vpop.permute.xlu0 %152
    %154 = vrot.lane.b32.xlu0 %v149, 64
    %v155 = vpop.permute.xlu0 %154
    %v158 = vadd.f32 %v92, %v153
    %v159 = vadd.f32 %v95, %v155
    %v160 = vld [vmem:[%s7] sm:$0xff]
    %v161 = vld [vmem:[%s9] sm:$0xff]
    %v162 = vld [vmem:[%s8] sm:$0xff]
    %164 = vset.pattern.permute.xlu0 0
    %165 = vperm.xlu0 %164, %v162
    %v166 = vpop.permute.xlu0 %165
    %169 = vrot.lane.b32.xlu0 %v158, 64
    %v170 = vpop.permute.xlu0 %169
    %v173 = vsel %vm67, %v160, 0
    %175 = vmatpush.msra.mxu0 0.0
    %176 = vmatpush.msra.mxu0 0.0
    %177 = vmatpush.msra.mxu0 0.0
    %178 = vmatpush.msra.mxu0 0.0
    %179 = vmatpush.msra.mxu0 0.0
    %180 = vmatpush.msra.mxu0 0.0
    %181 = vmatpush.msra.mxu0 0.0
    %182 = vmatpush.msra.mxu0 0.0
    %183 = vmatpush.msra.mxu0 0.0
    %184 = vmatpush.msra.mxu0 0.0
    %185 = vmatpush.msra.mxu0 0.0
    %186 = vmatpush.msra.mxu0 0.0
    %187 = vmatpush.msra.mxu0 0.0
    %188 = vmatpush.msra.mxu0 0.0
    %189 = vmatpush.msra.mxu0 0.0
    %190 = vmatpush.msra.mxu0 %v170
    %191 = vmatmul.f32.gmra.mxu0 %v173
    %v192 = vpop.f32.mrf.mxu0
    %v193 = vadd.f32 %v166, %v192
    %194 = vdwg.mxu0
    %196 = vrot.lane.b32.xlu0 %v159, 64
    %v197 = vpop.permute.xlu0 %196
    %199 = vmatpush.msra.mxu0 0.0
    %200 = vmatpush.msra.mxu0 0.0
    %201 = vmatpush.msra.mxu0 0.0
    %202 = vmatpush.msra.mxu0 0.0
    %203 = vmatpush.msra.mxu0 0.0
    %204 = vmatpush.msra.mxu0 0.0
    %205 = vmatpush.msra.mxu0 0.0
    %206 = vmatpush.msra.mxu0 0.0
    %207 = vmatpush.msra.mxu0 0.0
    %208 = vmatpush.msra.mxu0 0.0
    %209 = vmatpush.msra.mxu0 0.0
    %210 = vmatpush.msra.mxu0 0.0
    %211 = vmatpush.msra.mxu0 0.0
    %212 = vmatpush.msra.mxu0 0.0
    %213 = vmatpush.msra.mxu0 0.0
    %214 = vmatpush.msra.mxu0 %v197
    %215 = vmatmul.f32.gmra.mxu0 %v173
    %v216 = vpop.f32.mrf.mxu0
    %v217 = vadd.f32 %v166, %v216
    %218 = vdwg.mxu0
    %v219 = vld [vmem:[%s10] sm:$0xff]
    %221 = vset.pattern.permute.xlu0 0
    %222 = vperm.xlu0 %221, %v219
    %v223 = vpop.permute.xlu0 %222
    %225 = vrot.lane.b32.xlu0 %v158, 32
    %v226 = vpop.permute.xlu0 %225
    %v229 = vsel %vm67, %v161, 0
    %231 = vmatpush.msra.mxu0 0.0
    %232 = vmatpush.msra.mxu0 0.0
    %233 = vmatpush.msra.mxu0 0.0
    %234 = vmatpush.msra.mxu0 0.0
    %235 = vmatpush.msra.mxu0 0.0
    %236 = vmatpush.msra.mxu0 0.0
    %237 = vmatpush.msra.mxu0 0.0
    %238 = vmatpush.msra.mxu0 0.0
    %239 = vmatpush.msra.mxu0 0.0
    %240 = vmatpush.msra.mxu0 0.0
    %241 = vmatpush.msra.mxu0 0.0
    %242 = vmatpush.msra.mxu0 0.0
    %243 = vmatpush.msra.mxu0 0.0
    %244 = vmatpush.msra.mxu0 0.0
    %245 = vmatpush.msra.mxu0 0.0
    %246 = vmatpush.msra.mxu0 %v226
    %247 = vmatmul.f32.gmra.mxu0 %v229
    %v248 = vpop.f32.mrf.mxu0
    %v249 = vadd.f32 %v223, %v248
    %250 = vdwg.mxu0
    %251 = vrot.lane.b32.xlu0 %v159, 32
    %v252 = vpop.permute.xlu0 %251
    %254 = vmatpush.msra.mxu0 0.0
    %255 = vmatpush.msra.mxu0 0.0
    %256 = vmatpush.msra.mxu0 0.0
    %257 = vmatpush.msra.mxu0 0.0
    %258 = vmatpush.msra.mxu0 0.0
    %259 = vmatpush.msra.mxu0 0.0
    %260 = vmatpush.msra.mxu0 0.0
    %261 = vmatpush.msra.mxu0 0.0
    %262 = vmatpush.msra.mxu0 0.0
    %263 = vmatpush.msra.mxu0 0.0
    %264 = vmatpush.msra.mxu0 0.0
    %265 = vmatpush.msra.mxu0 0.0
    %266 = vmatpush.msra.mxu0 0.0
    %267 = vmatpush.msra.mxu0 0.0
    %268 = vmatpush.msra.mxu0 0.0
    %269 = vmatpush.msra.mxu0 %v252
    %270 = vmatmul.f32.gmra.mxu0 %v229
    %v271 = vpop.f32.mrf.mxu0
    %v272 = vadd.f32 %v223, %v271
    %273 = vdwg.mxu0
    %276 = vrot.lane.b32.xlu0 %v249, 32
    %v277 = vpop.permute.xlu0 %276
    %278 = vrot.lane.b32.xlu0 %v272, 32
    %v279 = vpop.permute.xlu0 %278
    %vm282 = vcmask 261120
    %v283 = vsel %vm282, %v193, %v277
    %v284 = vsel %vm282, %v217, %v279
    %v285 = vld [vmem:[%s11] sm:$0xff]
    %v286 = vld [vmem:[%s11 + $0x8] sm:$0xff]
    %v287 = vld [vmem:[%s11 + $0x10] sm:$0xff]
    %v288 = vld [vmem:[%s11 + $0x18] sm:$0xff]
    %v289 = vld [vmem:[%s11 + $0x20] sm:$0xff]
    %v290 = vld [vmem:[%s11 + $0x28] sm:$0xff]
    %v291 = vld [vmem:[%s11 + $0x30] sm:$0xff]
    %v292 = vld [vmem:[%s11 + $0x38] sm:$0xff]
    %v293 = vld [vmem:[%s12] sm:$0x1]
    %v295 = vperm.slane %v293, 0
    %vm297 = vcmask 523264
    %v299 = vsel %vm297, %v283, 0
    %v302 = vsel %vm297, %v284, 0
    %304 = vmatpush.msra.mxu0 0.0
    %305 = vmatpush.msra.mxu0 0.0
    %306 = vmatpush.msra.mxu0 0.0
    %307 = vmatpush.msra.mxu0 0.0
    %308 = vmatpush.msra.mxu0 0.0
    %309 = vmatpush.msra.mxu0 0.0
    %310 = vmatpush.msra.mxu0 0.0
    %311 = vmatpush.msra.mxu0 0.0
    %312 = vmatpush.msra.mxu0 %v292
    %313 = vmatpush.msra.mxu0 %v291
    %314 = vmatpush.msra.mxu0 %v290
    %315 = vmatpush.msra.mxu0 %v289
    %316 = vmatpush.msra.mxu0 %v288
    %317 = vmatpush.msra.mxu0 %v287
    %318 = vmatpush.msra.mxu0 %v286
    %319 = vmatpush.msra.mxu0 %v285
    %320 = vmatmul.f32.gmra.mxu0 %v299
    %v321 = vpop.f32.mrf.mxu0
    %v322 = vadd.f32 %v295, %v321
    %323 = vmatmul.f32.gmra.mxu0 %v302
    %v324 = vpop.f32.mrf.mxu0
    %v325 = vadd.f32 %v295, %v324
    %326 = vdwg.mxu0
    %v327 = vmul.f32 %v49, %v47
    %v328 = vmul.f32 %v50, %v48
    %v329 = vsub.f32 1.0, %v49
    %v330 = vsub.f32 1.0, %v50
    %v331 = vmul.f32 %v329, %v322
    %v332 = vmul.f32 %v330, %v325
    %v333 = vadd.f32 %v327, %v331
    %v334 = vadd.f32 %v328, %v332
    %335 = vst.msk [vmem:[%s13] sm:$0xff] %vm59, %v333
    %336 = vst.msk [vmem:[%s13 + $0x8] sm:$0xff] %vm59, %v334
    %v337 = vld [vmem:[%s2] sm:$0xff]
    %v338 = vld [vmem:[%s2 + $0x8] sm:$0xff]
    %v339 = vsub.f32 %v322, %v337
    %v340 = vsub.f32 %v325, %v338
    %v341 = vand.u32 2147483647, %v339
    %v342 = vand.u32 2147483647, %v340
    %v343 = vld [vmem:[%s3] sm:$0xff]
    %v344 = vld [vmem:[%s3 + $0x8] sm:$0xff]
    %v345 = vmul.f32 %v341, %v49
    %v346 = vmul.f32 %v342, %v50
    %v347 = vsel %vm59, %v345, 0.0
    %v348 = vsel %vm59, %v346, 0.0
    %v349 = vadd.f32 %v347, %v348
    %v350 = vrot.slane %v349, 4
    %v351 = vadd.f32 %v349, %v350
    %v352 = vrot.slane %v351, 2
    %v353 = vadd.f32 %v351, %v352
    %v354 = vrot.slane %v353, 1
    %v355 = vadd.f32 %v353, %v354
    %v356 = vsel %vm59, %v49, 0.0
    %v357 = vsel %vm59, %v50, 0.0
    %v358 = vadd.f32 %v356, %v357
    %v359 = vrot.slane %v358, 4
    %v360 = vadd.f32 %v358, %v359
    %v361 = vrot.slane %v360, 2
    %v362 = vadd.f32 %v360, %v361
    %v363 = vrot.slane %v362, 1
    %v364 = vadd.f32 %v362, %v363
    %v365 = vmul.f32 %v341, %v343
    %v366 = vmul.f32 %v342, %v344
    %v367 = vsel %vm59, %v365, 0.0
    %v368 = vsel %vm59, %v366, 0.0
    %v369 = vadd.f32 %v367, %v368
    %v370 = vrot.slane %v369, 4
    %v371 = vadd.f32 %v369, %v370
    %v372 = vrot.slane %v371, 2
    %v373 = vadd.f32 %v371, %v372
    %v374 = vrot.slane %v373, 1
    %v375 = vadd.f32 %v373, %v374
    %v376 = vsel %vm59, %v343, 0.0
    %v377 = vsel %vm59, %v344, 0.0
    %v378 = vadd.f32 %v376, %v377
    %v379 = vrot.slane %v378, 4
    %v380 = vadd.f32 %v378, %v379
    %v381 = vrot.slane %v380, 2
    %v382 = vadd.f32 %v380, %v381
    %v383 = vrot.slane %v382, 1
    %v384 = vadd.f32 %v382, %v383
    %vm385 = vcmask 1040384
    %v386 = vsel %vm385, %v355, %v364
    %vm387 = vcmask 1041408
    %v388 = vsel %vm387, %v386, %v375
    %vm389 = vcmask 1042432
    %v390 = vsel %vm389, %v388, %v384
    %vm391 = vcmask 27648
    %392 = vst.msk [vmem:[#allocation2] sm:$0xf] %vm391, %v390
    // Predicated region
    $region54: #{tpu_custom_call.1} parent=1 // pred_check
      _
    $region55: #{tpu_custom_call.1} parent=1 // pred_check_branch
      %394 = sbr.rel (0) target = $region57
    $region56: #{tpu_custom_call.1} parent=1 // pred_region
      _
    $region57: #{tpu_custom_call.1} parent=1 // pred_fallthru
      _
    // Predicated region
    $region58: #{tpu_custom_call.1} parent=1 // pred_check
      _
    $region59: #{tpu_custom_call.1} parent=1 // pred_check_branch
      %396 = sbr.rel (0) target = $region61
    $region60: #{tpu_custom_call.1} parent=1 // pred_region
      %398 = vsyncadd [#allocation3], 0
      %s400 = sshll.u32 [#allocation2], 4
      %s401 = int_to_ptr.vmem [resolvable:$true] %s400
      %s402 = sshll.u32 %s14, 4
      %s403 = int_to_ptr.hbm [resolvable:$true] %s402
      %405 = dma.vmem_to_hbm [thread:$0]  %s401, 64, %s403, [#allocation3]
    $region61: #{tpu_custom_call.1} parent=1 // pred_fallthru
      _
    // Predicated region
    $region62: #{tpu_custom_call.1} parent=1 // pred_check
      _
    $region63: #{tpu_custom_call.1} parent=1 // pred_check_branch
      %407 = sbr.rel (0) target = $region65
    $region64: #{tpu_custom_call.1} parent=1 // pred_region
      _
    $region65: #{tpu_custom_call.1} parent=1 // pred_fallthru
      _
    // Predicated region
    $region66: #{tpu_custom_call.1} parent=1 // pred_check
      _
    $region67: #{tpu_custom_call.1} parent=1 // pred_check_branch
      %409 = sbr.rel (0) target = $region69
    $region68: #{tpu_custom_call.1} parent=1 // pred_region
      %411 = dma.done [#allocation3], 64
    $region69: #{tpu_custom_call.1} parent=1 // pred_fallthru
      _
    %412 = vsyncpa [#allocation3], 1

</llo_original>
